<compile_context>
chip_gen: v5e
topology: v5e:2x2
jax: 0.10.0
libtpu: 0.0.40
codegen_flags: <defaults>
</compile_context>

<pallas_src>
import functools

import jax
import jax.numpy as jnp
from jax import lax
from jax.experimental import pallas as pl
from jax.experimental.pallas import tpu as pltpu

EPSILON = 0.01
_THRESH = 1.0 - EPSILON

_ROW_CHUNK = 8     # sublanes per in-kernel chunk (one f32 sublane group)
_COL_CHUNK = 512   # lanes per in-kernel chunk (4 vregs per f32 array)


def _pop_encoder_kernel(ae_ref, xs_ref, volt_ref, *, nt_chunk, unroll):
    """One grid step = one (batch-tile, time-chunk).

    ae_ref   : (tb, d)            Gaussian receptive-field activation (input)
    xs_ref   : (nt_chunk, tb, d)  output spikes for this tile / time chunk
    volt_ref : (tb, d)            membrane voltage carried across time chunks
    """
    t_chunk = pl.program_id(1)

    @pl.when(t_chunk == 0)
    def _():
        volt_ref[...] = jnp.zeros_like(volt_ref)

    tb, td = ae_ref.shape
    col_chunks = [(c, min(_COL_CHUNK, td - c)) for c in range(0, td, _COL_CHUNK)]
    n_row_groups = tb // _ROW_CHUNK
    tail_rows = tb - n_row_groups * _ROW_CHUNK

    def process_rows(r0, rs):
        # Integrate-and-fire over nt_chunk steps for a vreg-sized (rs, cw)
        # chunk; voltage and ae stay in vregs via the fori_loop carry.
        for c0, cw in col_chunks:
            rows = pl.ds(r0, rs)
            cols = pl.ds(c0, cw)
            ae = ae_ref[rows, cols]
            volt = volt_ref[rows, cols]

            def step(tt, carry):
                v, a = carry
                v = v + a
                fired = v > _THRESH                       # pop_firing: strict >
                xs_ref[tt, rows, cols] = fired.astype(jnp.float32)
                v = jnp.where(fired, v - _THRESH, v)      # == v - spike*(1-EPS)
                return (v, a)

            volt, _ = lax.fori_loop(0, nt_chunk, step, (volt, ae), unroll=unroll)
            volt_ref[rows, cols] = volt

    if n_row_groups > 0:
        def row_body(r, carry):
            process_rows(pl.multiple_of(r * _ROW_CHUNK, _ROW_CHUNK), _ROW_CHUNK)
            return carry
        lax.fori_loop(0, n_row_groups, row_body, 0)
    if tail_rows > 0:
        process_rows(n_row_groups * _ROW_CHUNK, tail_rows)


def _expand_population_params(mu, sigma, pop_dim):
    """Replicates PopEncoder.__init__ for pop_dim > 1 (or passes through)."""
    mu = jnp.asarray(mu, jnp.float32)
    sigma = jnp.asarray(sigma, jnp.float32)
    if pop_dim == 1:
        return mu, sigma
    alpha = 3.0
    mu_max = mu + sigma * alpha / 2.0
    mu_min = mu - sigma * alpha / 2.0
    mu_delta = (mu_max - mu_min) / (pop_dim - 1)
    idx = jnp.arange(pop_dim, dtype=jnp.float32)
    # mu_[i*pop_dim + p] = mu_min[i] + mu_delta[i] * p   (matches .T.flatten())
    mu_full = (mu_min[:, None] + mu_delta[:, None] * idx[None, :]).reshape(-1)
    sigma_full = jnp.repeat(sigma, pop_dim)
    return mu_full, sigma_full


def _round_up(n, m):
    return ((n + m - 1) // m) * m


def _largest_divisor_multiple(n, unit, cap):
    """Largest multiple of `unit` that divides n and is <= cap (n % unit == 0)."""
    cap = min(cap, n)
    k = (cap // unit) * unit
    while k > unit:
        if n % k == 0:
            return k
        k -= unit
    return unit


def _largest_divisor(n, cap):
    cap = max(1, min(cap, n))
    for k in range(cap, 0, -1):
        if n % k == 0:
            return k
    return 1


def _plan_tiles(rows_total, row_unit, d, nt, total_budget):
    """Pick (nt_chunk, tb) so the resident VMEM footprint
    2*out_block + 2*ae_block + volt_scratch = (2*nt_chunk + 3) * tb * d * 4
    stays within total_budget, with blocks dividing their arrays exactly."""
    row_bytes = d * 4
    max_ntc = int((total_budget // (row_unit * row_bytes) - 3) // 2)
    nt_chunk = _largest_divisor(nt, max(1, max_ntc))
    tb_cap = total_budget // ((2 * nt_chunk + 3) * row_bytes)
    tb = _largest_divisor_multiple(rows_total, row_unit, max(row_unit, tb_cap))
    need = (2 * nt_chunk + 3) * tb * row_bytes
    return nt_chunk, tb, need


@functools.partial(jax.jit, static_argnames=("pop_dim", "nt", "block_budget_bytes"))
def pop_encoder_forward(x, mu, sigma, *, pop_dim, nt, block_budget_bytes=None):
    """Pallas implementation of PopEncoder.forward.

    x: [batch, input_dim] float32
    returns xs: [nt, batch, input_dim * pop_dim] float32 (0/1 spikes)
    """
    batch, input_dim = x.shape
    d = input_dim * pop_dim
    mu_full, sigma_full = _expand_population_params(mu, sigma, pop_dim)

    # Gaussian receptive-field activation, computed once with broadcasting
    # (no materialized jnp.repeat of x into a [batch, d] HBM array).
    x = x.astype(jnp.float32)
    mu2 = mu_full.reshape(input_dim, pop_dim)
    sg2 = sigma_full.reshape(input_dim, pop_dim)
    z = (x[:, :, None] - mu2[None, :, :]) / sg2[None, :, :]
    ae = jnp.exp(-0.5 * z * z).reshape(batch, d)

    # ---- generation-aware VMEM budget -------------------------------------
    try:
        vmem_capacity = int(pltpu.get_tpu_info().vmem_capacity_bytes)
    except Exception:  # e.g. interpret mode; assume the smallest (v7x) VMEM
        vmem_capacity = 64 << 20
    if block_budget_bytes is not None:
        total_budget = int(block_budget_bytes)
    elif vmem_capacity >= (96 << 20):   # v5e / v6e: 128 MiB physical VMEM
        total_budget = 80 << 20
    else:                               # v7x: 64 MiB physical VMEM
        total_budget = 40 << 20

    # ---- tiling -------------------------------------------------------------
    # Full feature width per block (contiguous HBM writeback, no lane padding,
    # no post-kernel slice).  Batch is the tiled ("parallel") axis; time is
    # chunked on a trailing "arbitrary" axis with a voltage scratch carry.
    pad_rows = False
    rows_total = batch
    row_unit = 8 if batch % 8 == 0 else batch  # full-batch block is always legal
    nt_chunk, tb, need = _plan_tiles(rows_total, row_unit, d, nt, total_budget)
    if need > total_budget and batch % 8 != 0 and batch > 8:
        # Rare fallback: pad the batch axis so it can be tiled in units of 8.
        pad_rows = True
        rows_total = _round_up(batch, 8)
        row_unit = 8
        nt_chunk, tb, need = _plan_tiles(rows_total, row_unit, d, nt, total_budget)

    # v7x has 2 TensorCores: make sure the "parallel" axis has >= 2 blocks.
    if (vmem_capacity < (96 << 20) and rows_total // tb == 1
            and row_unit == 8 and tb % 16 == 0):
        tb //= 2
        need = (2 * nt_chunk + 3) * tb * d * 4

    if pad_rows:
        # Padded rows have Ae == 0 -> voltage stays 0 -> spikes stay 0.
        ae = jnp.pad(ae, ((0, rows_total - batch), (0, 0)))

    n_row_tiles = rows_total // tb
    n_time_chunks = nt // nt_chunk
    unroll = nt_chunk if nt_chunk <= 16 else 8
    vmem_limit = int(max(need + (8 << 20), 32 << 20))

    xs = pl.pallas_call(
        functools.partial(_pop_encoder_kernel, nt_chunk=nt_chunk, unroll=unroll),
        out_shape=jax.ShapeDtypeStruct((nt, rows_total, d), jnp.float32),
        grid_spec=pltpu.PrefetchScalarGridSpec(
            num_scalar_prefetch=0,
            grid=(n_row_tiles, n_time_chunks),
            in_specs=[pl.BlockSpec((tb, d), lambda i, t: (i, 0))],
            out_specs=pl.BlockSpec((nt_chunk, tb, d), lambda i, t: (t, i, 0)),
            scratch_shapes=[pltpu.VMEM((tb, d), jnp.float32)],
        ),
        compiler_params=pltpu.CompilerParams(
            dimension_semantics=("parallel", "arbitrary"),
            vmem_limit_bytes=vmem_limit,
        ),
    )(ae)

    if pad_rows:
        xs = xs[:, :batch, :]
    return xs


def pop_encoder_reference(x, mu, sigma, *, pop_dim, nt):
    """Pure-JAX reference mirroring the PyTorch forward (for validation)."""
    batch, input_dim = x.shape
    mu_full, sigma_full = _expand_population_params(mu, sigma, pop_dim)
    if pop_dim > 1:
        x = jnp.repeat(x.astype(jnp.float32), pop_dim, axis=1)
    ae = jnp.exp(-0.5 * ((x - mu_full) / sigma_full) ** 2)
    voltage = jnp.zeros((batch, input_dim * pop_dim), jnp.float32)
    outs = []
    for _ in range(nt):
        voltage = voltage + ae
        spike = (voltage > _THRESH).astype(jnp.float32)
        outs.append(spike)
        voltage = voltage - spike * _THRESH
    return jnp.stack(outs, axis=0)


if __name__ == "__main__":
    # (batch, input_dim, pop_dim, nt, block_budget_bytes)
    configs = [
        (2, 4, 8, 8, None),      # module-sized: batch=2, d=32, single block
        (10, 5, 3, 7, None),     # batch % 8 != 0 -> full-batch tile + row tail
        (16, 6, 4, 12, 16384),   # tiny budget -> time-chunked grid + volt carry
    ]
    key = jax.random.PRNGKey(0)
    for (batch, input_dim, pop_dim, nt, budget) in configs:
        key, kx = jax.random.split(key)
        x = jax.random.uniform(kx, (batch, input_dim), dtype=jnp.float32)
        mu = jnp.linspace(0.2, 0.8, input_dim, dtype=jnp.float32)
        sigma = jnp.full((input_dim,), 0.25, dtype=jnp.float32)

        xs = pop_encoder_forward(x, mu, sigma, pop_dim=pop_dim, nt=nt,
                                 block_budget_bytes=budget)
        xs = jax.block_until_ready(xs)

        xs_ref = pop_encoder_reference(x, mu, sigma, pop_dim=pop_dim, nt=nt)
        assert xs.shape == (nt, batch, input_dim * pop_dim), xs.shape
        assert jnp.allclose(xs, xs_ref), (
            f"mismatch vs. pure-JAX reference for config "
            f"{(batch, input_dim, pop_dim, nt, budget)}")

    print("KERNEL_OK")
</pallas_src>

<mosaic_0001>
module attributes {stable_mosaic.version = 11 : i64} {
  func.func @_pop_encoder_kernel(%arg0: i32, %arg1: i32, %arg2: memref<2x32xf32, #tpu.memory_space<vmem>>, %arg3: memref<8x2x32xf32, #tpu.memory_space<vmem>>, %arg4: memref<2x32xf32, #tpu.memory_space<vmem>>) attributes {dimension_semantics = [#tpu.dimension_semantics<parallel>, #tpu.dimension_semantics<arbitrary>], iteration_bounds = array<i64: 1, 1>, scalar_prefetch = 0 : i64, scratch_operands = 1 : i64, tpu.core_type = #tpu.core_type<tc>, window_params = [{transform_indices = @transform_0, window_bounds = array<i64: 2, 32>}, {transform_indices = @transform_1, window_bounds = array<i64: 8, 2, 32>}]} {
    %c0_i32 = arith.constant 0 : i32
    %0 = arith.cmpi eq, %arg1, %c0_i32 : i32
    %1 = arith.extui %0 : i1 to i32
    %c0_i32_0 = arith.constant 0 : i32
    %2 = arith.cmpi ne, %1, %c0_i32_0 : i32
    scf.if %2 {
      %cst_38 = arith.constant 0.000000e+00 : f32
      %102 = vector.broadcast %cst_38 : f32 to vector<2x32xf32>
      %c0_39 = arith.constant 0 : index
      %c0_40 = arith.constant 0 : index
      %103 = vector.load %arg4[%c0_39, %c0_40] : memref<2x32xf32, #tpu.memory_space<vmem>>, vector<2x32xf32>
      tpu.vector_store %arg4[%c0_39, %c0_40], %102 {strides = array<i32>} : memref<2x32xf32, #tpu.memory_space<vmem>>, vector<2x32xf32>,
    } else {
    }
    %c0 = arith.constant 0 : index
    %c0_1 = arith.constant 0 : index
    %3 = vector.load %arg2[%c0, %c0_1] : memref<2x32xf32, #tpu.memory_space<vmem>>, vector<2x32xf32>
    %c0_2 = arith.constant 0 : index
    %c0_3 = arith.constant 0 : index
    %4 = vector.load %arg4[%c0_2, %c0_3] : memref<2x32xf32, #tpu.memory_space<vmem>>, vector<2x32xf32>
    %c0_i32_4 = arith.constant 0 : i32
    %5 = arith.addf %4, %3 : vector<2x32xf32>
    %cst = arith.constant 9.900000e-01 : f32
    %6 = vector.broadcast %cst : f32 to vector<2x32xf32>
    %7 = arith.cmpf ogt, %5, %6 : vector<2x32xf32>
    %8 = arith.extui %7 : vector<2x32xi1> to vector<2x32xi32>
    %9 = arith.sitofp %8 : vector<2x32xi32> to vector<2x32xf32>
    %10 = arith.index_cast %c0_i32_4 : i32 to index
    %c0_5 = arith.constant 0 : index
    %c0_6 = arith.constant 0 : index
    %11 = vector.load %arg3[%10, %c0_5, %c0_6] : memref<8x2x32xf32, #tpu.memory_space<vmem>>, vector<1x2x32xf32>
    %12 = vector.shape_cast %11 : vector<1x2x32xf32> to vector<2x32xf32>
    %13 = vector.shape_cast %9 : vector<2x32xf32> to vector<1x2x32xf32>
    tpu.vector_store %arg3[%10, %c0_5, %c0_6], %13 {strides = array<i32>} : memref<8x2x32xf32, #tpu.memory_space<vmem>>, vector<1x2x32xf32>,
    %cst_7 = arith.constant 9.900000e-01 : f32
    %14 = vector.broadcast %cst_7 : f32 to vector<2x32xf32>
    %15 = arith.subf %5, %14 : vector<2x32xf32>
    %16 = arith.select %7, %15, %5 : vector<2x32xi1>, vector<2x32xf32>
    %c1_i32 = arith.constant 1 : i32
    %17 = arith.addf %16, %3 : vector<2x32xf32>
    %cst_8 = arith.constant 9.900000e-01 : f32
    %18 = vector.broadcast %cst_8 : f32 to vector<2x32xf32>
    %19 = arith.cmpf ogt, %17, %18 : vector<2x32xf32>
    %20 = arith.extui %19 : vector<2x32xi1> to vector<2x32xi32>
    %21 = arith.sitofp %20 : vector<2x32xi32> to vector<2x32xf32>
    %22 = arith.index_cast %c1_i32 : i32 to index
    %c0_9 = arith.constant 0 : index
    %c0_10 = arith.constant 0 : index
    %23 = vector.load %arg3[%22, %c0_9, %c0_10] : memref<8x2x32xf32, #tpu.memory_space<vmem>>, vector<1x2x32xf32>
    %24 = vector.shape_cast %23 : vector<1x2x32xf32> to vector<2x32xf32>
    %25 = vector.shape_cast %21 : vector<2x32xf32> to vector<1x2x32xf32>
    tpu.vector_store %arg3[%22, %c0_9, %c0_10], %25 {strides = array<i32>} : memref<8x2x32xf32, #tpu.memory_space<vmem>>, vector<1x2x32xf32>,
    %cst_11 = arith.constant 9.900000e-01 : f32
    %26 = vector.broadcast %cst_11 : f32 to vector<2x32xf32>
    %27 = arith.subf %17, %26 : vector<2x32xf32>
    %28 = arith.select %19, %27, %17 : vector<2x32xi1>, vector<2x32xf32>
    %c2_i32 = arith.constant 2 : i32
    %29 = arith.addf %28, %3 : vector<2x32xf32>
    %cst_12 = arith.constant 9.900000e-01 : f32
    %30 = vector.broadcast %cst_12 : f32 to vector<2x32xf32>
    %31 = arith.cmpf ogt, %29, %30 : vector<2x32xf32>
    %32 = arith.extui %31 : vector<2x32xi1> to vector<2x32xi32>
    %33 = arith.sitofp %32 : vector<2x32xi32> to vector<2x32xf32>
    %34 = arith.index_cast %c2_i32 : i32 to index
    %c0_13 = arith.constant 0 : index
    %c0_14 = arith.constant 0 : index
    %35 = vector.load %arg3[%34, %c0_13, %c0_14] : memref<8x2x32xf32, #tpu.memory_space<vmem>>, vector<1x2x32xf32>
    %36 = vector.shape_cast %35 : vector<1x2x32xf32> to vector<2x32xf32>
    %37 = vector.shape_cast %33 : vector<2x32xf32> to vector<1x2x32xf32>
    tpu.vector_store %arg3[%34, %c0_13, %c0_14], %37 {strides = array<i32>} : memref<8x2x32xf32, #tpu.memory_space<vmem>>, vector<1x2x32xf32>,
    %cst_15 = arith.constant 9.900000e-01 : f32
    %38 = vector.broadcast %cst_15 : f32 to vector<2x32xf32>
    %39 = arith.subf %29, %38 : vector<2x32xf32>
    %40 = arith.select %31, %39, %29 : vector<2x32xi1>, vector<2x32xf32>
    %c3_i32 = arith.constant 3 : i32
    %41 = arith.addf %40, %3 : vector<2x32xf32>
    %cst_16 = arith.constant 9.900000e-01 : f32
    %42 = vector.broadcast %cst_16 : f32 to vector<2x32xf32>
    %43 = arith.cmpf ogt, %41, %42 : vector<2x32xf32>
    %44 = arith.extui %43 : vector<2x32xi1> to vector<2x32xi32>
    %45 = arith.sitofp %44 : vector<2x32xi32> to vector<2x32xf32>
    %46 = arith.index_cast %c3_i32 : i32 to index
    %c0_17 = arith.constant 0 : index
    %c0_18 = arith.constant 0 : index
    %47 = vector.load %arg3[%46, %c0_17, %c0_18] : memref<8x2x32xf32, #tpu.memory_space<vmem>>, vector<1x2x32xf32>
    %48 = vector.shape_cast %47 : vector<1x2x32xf32> to vector<2x32xf32>
    %49 = vector.shape_cast %45 : vector<2x32xf32> to vector<1x2x32xf32>
    tpu.vector_store %arg3[%46, %c0_17, %c0_18], %49 {strides = array<i32>} : memref<8x2x32xf32, #tpu.memory_space<vmem>>, vector<1x2x32xf32>,
    %cst_19 = arith.constant 9.900000e-01 : f32
    %50 = vector.broadcast %cst_19 : f32 to vector<2x32xf32>
    %51 = arith.subf %41, %50 : vector<2x32xf32>
    %52 = arith.select %43, %51, %41 : vector<2x32xi1>, vector<2x32xf32>
    %c4_i32 = arith.constant 4 : i32
    %53 = arith.addf %52, %3 : vector<2x32xf32>
    %cst_20 = arith.constant 9.900000e-01 : f32
    %54 = vector.broadcast %cst_20 : f32 to vector<2x32xf32>
    %55 = arith.cmpf ogt, %53, %54 : vector<2x32xf32>
    %56 = arith.extui %55 : vector<2x32xi1> to vector<2x32xi32>
    %57 = arith.sitofp %56 : vector<2x32xi32> to vector<2x32xf32>
    %58 = arith.index_cast %c4_i32 : i32 to index
    %c0_21 = arith.constant 0 : index
    %c0_22 = arith.constant 0 : index
    %59 = vector.load %arg3[%58, %c0_21, %c0_22] : memref<8x2x32xf32, #tpu.memory_space<vmem>>, vector<1x2x32xf32>
    %60 = vector.shape_cast %59 : vector<1x2x32xf32> to vector<2x32xf32>
    %61 = vector.shape_cast %57 : vector<2x32xf32> to vector<1x2x32xf32>
    tpu.vector_store %arg3[%58, %c0_21, %c0_22], %61 {strides = array<i32>} : memref<8x2x32xf32, #tpu.memory_space<vmem>>, vector<1x2x32xf32>,
    %cst_23 = arith.constant 9.900000e-01 : f32
    %62 = vector.broadcast %cst_23 : f32 to vector<2x32xf32>
    %63 = arith.subf %53, %62 : vector<2x32xf32>
    %64 = arith.select %55, %63, %53 : vector<2x32xi1>, vector<2x32xf32>
    %c5_i32 = arith.constant 5 : i32
    %65 = arith.addf %64, %3 : vector<2x32xf32>
    %cst_24 = arith.constant 9.900000e-01 : f32
    %66 = vector.broadcast %cst_24 : f32 to vector<2x32xf32>
    %67 = arith.cmpf ogt, %65, %66 : vector<2x32xf32>
    %68 = arith.extui %67 : vector<2x32xi1> to vector<2x32xi32>
    %69 = arith.sitofp %68 : vector<2x32xi32> to vector<2x32xf32>
    %70 = arith.index_cast %c5_i32 : i32 to index
    %c0_25 = arith.constant 0 : index
    %c0_26 = arith.constant 0 : index
    %71 = vector.load %arg3[%70, %c0_25, %c0_26] : memref<8x2x32xf32, #tpu.memory_space<vmem>>, vector<1x2x32xf32>
    %72 = vector.shape_cast %71 : vector<1x2x32xf32> to vector<2x32xf32>
    %73 = vector.shape_cast %69 : vector<2x32xf32> to vector<1x2x32xf32>
    tpu.vector_store %arg3[%70, %c0_25, %c0_26], %73 {strides = array<i32>} : memref<8x2x32xf32, #tpu.memory_space<vmem>>, vector<1x2x32xf32>,
    %cst_27 = arith.constant 9.900000e-01 : f32
    %74 = vector.broadcast %cst_27 : f32 to vector<2x32xf32>
    %75 = arith.subf %65, %74 : vector<2x32xf32>
    %76 = arith.select %67, %75, %65 : vector<2x32xi1>, vector<2x32xf32>
    %c6_i32 = arith.constant 6 : i32
    %77 = arith.addf %76, %3 : vector<2x32xf32>
    %cst_28 = arith.constant 9.900000e-01 : f32
    %78 = vector.broadcast %cst_28 : f32 to vector<2x32xf32>
    %79 = arith.cmpf ogt, %77, %78 : vector<2x32xf32>
    %80 = arith.extui %79 : vector<2x32xi1> to vector<2x32xi32>
    %81 = arith.sitofp %80 : vector<2x32xi32> to vector<2x32xf32>
    %82 = arith.index_cast %c6_i32 : i32 to index
    %c0_29 = arith.constant 0 : index
    %c0_30 = arith.constant 0 : index
    %83 = vector.load %arg3[%82, %c0_29, %c0_30] : memref<8x2x32xf32, #tpu.memory_space<vmem>>, vector<1x2x32xf32>
    %84 = vector.shape_cast %83 : vector<1x2x32xf32> to vector<2x32xf32>
    %85 = vector.shape_cast %81 : vector<2x32xf32> to vector<1x2x32xf32>
    tpu.vector_store %arg3[%82, %c0_29, %c0_30], %85 {strides = array<i32>} : memref<8x2x32xf32, #tpu.memory_space<vmem>>, vector<1x2x32xf32>,
    %cst_31 = arith.constant 9.900000e-01 : f32
    %86 = vector.broadcast %cst_31 : f32 to vector<2x32xf32>
    %87 = arith.subf %77, %86 : vector<2x32xf32>
    %88 = arith.select %79, %87, %77 : vector<2x32xi1>, vector<2x32xf32>
    %c7_i32 = arith.constant 7 : i32
    %89 = arith.addf %88, %3 : vector<2x32xf32>
    %cst_32 = arith.constant 9.900000e-01 : f32
    %90 = vector.broadcast %cst_32 : f32 to vector<2x32xf32>
    %91 = arith.cmpf ogt, %89, %90 : vector<2x32xf32>
    %92 = arith.extui %91 : vector<2x32xi1> to vector<2x32xi32>
    %93 = arith.sitofp %92 : vector<2x32xi32> to vector<2x32xf32>
    %94 = arith.index_cast %c7_i32 : i32 to index
    %c0_33 = arith.constant 0 : index
    %c0_34 = arith.constant 0 : index
    %95 = vector.load %arg3[%94, %c0_33, %c0_34] : memref<8x2x32xf32, #tpu.memory_space<vmem>>, vector<1x2x32xf32>
    %96 = vector.shape_cast %95 : vector<1x2x32xf32> to vector<2x32xf32>
    %97 = vector.shape_cast %93 : vector<2x32xf32> to vector<1x2x32xf32>
    tpu.vector_store %arg3[%94, %c0_33, %c0_34], %97 {strides = array<i32>} : memref<8x2x32xf32, #tpu.memory_space<vmem>>, vector<1x2x32xf32>,
    %cst_35 = arith.constant 9.900000e-01 : f32
    %98 = vector.broadcast %cst_35 : f32 to vector<2x32xf32>
    %99 = arith.subf %89, %98 : vector<2x32xf32>
    %100 = arith.select %91, %99, %89 : vector<2x32xi1>, vector<2x32xf32>
    %c8_i32 = arith.constant 8 : i32
    %c0_36 = arith.constant 0 : index
    %c0_37 = arith.constant 0 : index
    %101 = vector.load %arg4[%c0_36, %c0_37] : memref<2x32xf32, #tpu.memory_space<vmem>>, vector<2x32xf32>
    tpu.vector_store %arg4[%c0_36, %c0_37], %100 {strides = array<i32>} : memref<2x32xf32, #tpu.memory_space<vmem>>, vector<2x32xf32>,
    return
  }
  func.func @transform_0(%arg0: i32, %arg1: i32) -> (i32, i32) {
    %c0_i32 = arith.constant 0 : i32
    %c0_i32_0 = arith.constant 0 : i32
    return %arg0, %c0_i32 : i32, i32
  }
  func.func @transform_1(%arg0: i32, %arg1: i32) -> (i32, i32, i32) {
    %c0_i32 = arith.constant 0 : i32
    %c0_i32_0 = arith.constant 0 : i32
    return %arg1, %arg0, %c0_i32 : i32, i32, i32
  }
}

</mosaic_0001>

<llo_original>
// kernel: pop_encoder_forward.1
$region0: #{pop_encoder_forward.1}
  #allocation0 [shape = 'u32[]', space=smem, size = 0x4, offset = 0x4, fixed_abs, tag = 'smem constant byte address 0x4 - core index']
  #allocation1 [shape = 'u32[72,128]{1,0:T(1,128)}', space=vmem, size = 0x9000, scoped, tag = 'internal scratch']
  #allocation2 [shape = 'f32[2,32]{1,0:T(2,128)}', space=vmem, size = 0x400, scoped, tag = 'scratch operand']
  %s0 = inlined_call_operand.vmem [shape: f32[2,32], index: 0, kind: input, shape index: {}]
  %s1 = inlined_call_operand.hbm [shape: f32[8,2,32], index: 1, kind: output, shape index: {}]
  %s2 = sld [smem:[#allocation0]]
  $region18: #{pop_encoder_forward.1} parent=0
    _
  %s4 = ssub.s32 1, %s2
  %s5 = scalar_select 0, %s4, %s2
  $region1: #{pop_encoder_forward.1} parent=0
    #allocation3 [shape = 'u8[8192]{0}', space=vmem, size = 0x2000, scoped, tag = 'output window, operand 0, single buffered']
    #allocation4 [shape = 's32[1]{0}', space=sflag, size = 0x4, scoped, tag = 'scoped memory for pop_encoder_forward.1']
    %6 = vsyncpa [#allocation4], 0
    // Predicated region
    $region2: #{pop_encoder_forward.1} parent=1 // pred_check
      _
    $region3: #{pop_encoder_forward.1} parent=1 // pred_check_branch
      %8 = sbr.rel (0) target = $region5
    $region4: #{pop_encoder_forward.1} parent=1 // pred_region
      _
    $region5: #{pop_encoder_forward.1} parent=1 // pred_fallthru
      _
    %p9 = scmp.eq.s32.totalorder 0, 0
    // Predicated region
    $region6: #{pop_encoder_forward.1} parent=1 // pred_check
      %p10 = pneg %p9
    $region7: #{pop_encoder_forward.1} parent=1 // pred_check_branch
      %12 = sbr.rel (%p10) target = $region9
    $region8: #{pop_encoder_forward.1} parent=1 // pred_region
      %vm13 = vcmask 254976
      %14 = vst.msk [vmem:[#allocation2] sm:$0x3] %vm13, 0.0
    $region9: #{pop_encoder_forward.1} parent=1 // pred_fallthru
      _
    %v15 = vld [vmem:[%s0] sm:$0x3]
    %v16 = vld [vmem:[#allocation2] sm:$0x3]
    %v17 = vadd.f32 %v16, %v15
    %vm18 = vcmp.gt.f32.partialorder %v17, 0.99
    %v19 = vsel %vm18, 1, 0
    %v20 = vcvt.s32.f32 %v19
    %vm21 = vcmask 254976
    %22 = vst.msk [vmem:[#allocation3] sm:$0x3] %vm21, %v20
    %v23 = vsub.f32 %v17, 0.99
    %v24 = vsel %vm18, %v23, %v17
    %v25 = vadd.f32 %v24, %v15
    %vm26 = vcmp.gt.f32.partialorder %v25, 0.99
    %v27 = vsel %vm26, 1, 0
    %v28 = vcvt.s32.f32 %v27
    %s29 = scalar_lea.vmem [#allocation3], 2
    %30 = vst.msk [vmem:[%s29] sm:$0x3] %vm21, %v28
    %v31 = vsub.f32 %v25, 0.99
    %v32 = vsel %vm26, %v31, %v25
    %v33 = vadd.f32 %v32, %v15
    %vm34 = vcmp.gt.f32.partialorder %v33, 0.99
    %v35 = vsel %vm34, 1, 0
    %v36 = vcvt.s32.f32 %v35
    %s37 = scalar_lea.vmem [#allocation3], 4
    %38 = vst.msk [vmem:[%s37] sm:$0x3] %vm21, %v36
    %v39 = vsub.f32 %v33, 0.99
    %v40 = vsel %vm34, %v39, %v33
    %v41 = vadd.f32 %v40, %v15
    %vm42 = vcmp.gt.f32.partialorder %v41, 0.99
    %v43 = vsel %vm42, 1, 0
    %v44 = vcvt.s32.f32 %v43
    %s45 = scalar_lea.vmem [#allocation3], 6
    %46 = vst.msk [vmem:[%s45] sm:$0x3] %vm21, %v44
    %v47 = vsub.f32 %v41, 0.99
    %v48 = vsel %vm42, %v47, %v41
    %v49 = vadd.f32 %v48, %v15
    %vm50 = vcmp.gt.f32.partialorder %v49, 0.99
    %v51 = vsel %vm50, 1, 0
    %v52 = vcvt.s32.f32 %v51
    %s53 = scalar_lea.vmem [#allocation3], 8
    %54 = vst.msk [vmem:[%s53] sm:$0x3] %vm21, %v52
    %v55 = vsub.f32 %v49, 0.99
    %v56 = vsel %vm50, %v55, %v49
    %v57 = vadd.f32 %v56, %v15
    %vm58 = vcmp.gt.f32.partialorder %v57, 0.99
    %v59 = vsel %vm58, 1, 0
    %v60 = vcvt.s32.f32 %v59
    %s61 = scalar_lea.vmem [#allocation3], 10
    %62 = vst.msk [vmem:[%s61] sm:$0x3] %vm21, %v60
    %v63 = vsub.f32 %v57, 0.99
    %v64 = vsel %vm58, %v63, %v57
    %v65 = vadd.f32 %v64, %v15
    %vm66 = vcmp.gt.f32.partialorder %v65, 0.99
    %v67 = vsel %vm66, 1, 0
    %v68 = vcvt.s32.f32 %v67
    %s69 = scalar_lea.vmem [#allocation3], 12
    %70 = vst.msk [vmem:[%s69] sm:$0x3] %vm21, %v68
    %v71 = vsub.f32 %v65, 0.99
    %v72 = vsel %vm66, %v71, %v65
    %v73 = vadd.f32 %v72, %v15
    %vm74 = vcmp.gt.f32.partialorder %v73, 0.99
    %v75 = vsel %vm74, 1, 0
    %v76 = vcvt.s32.f32 %v75
    %s77 = scalar_lea.vmem [#allocation3], 14
    %78 = vst.msk [vmem:[%s77] sm:$0x3] %vm21, %v76
    %v79 = vsub.f32 %v73, 0.99
    %v80 = vsel %vm74, %v79, %v73
    %81 = vst.msk [vmem:[#allocation2] sm:$0x3] %vm21, %v80
    // Predicated region
    $region10: #{pop_encoder_forward.1} parent=1 // pred_check
      _
    $region11: #{pop_encoder_forward.1} parent=1 // pred_check_branch
      %83 = sbr.rel (0) target = $region13
    $region12: #{pop_encoder_forward.1} parent=1 // pred_region
      %85 = vsyncadd [#allocation4], 0
      %s86 = sshll.u32 [#allocation3], 4
      %s87 = int_to_ptr.vmem [resolvable:$true] %s86
      %s88 = sshll.u32 %s1, 4
      %s89 = int_to_ptr.hbm [resolvable:$true] %s88
      %94 = dma.vmem_to_hbm [thread:$0]  %s87, 256, %s89, [#allocation4], 32, 32, 2
    $region13: #{pop_encoder_forward.1} parent=1 // pred_fallthru
      _
    // Predicated region
    $region14: #{pop_encoder_forward.1} parent=1 // pred_check
      _
    $region15: #{pop_encoder_forward.1} parent=1 // pred_check_branch
      %96 = sbr.rel (0) target = $region17
    $region16: #{pop_encoder_forward.1} parent=1 // pred_region
      %98 = dma.done [#allocation4], 256
    $region17: #{pop_encoder_forward.1} parent=1 // pred_fallthru
      _
    %99 = vsyncpa [#allocation4], 1

</llo_original>
